<compile_context>
chip_gen: v7x
topology: tpu7x:2x2x1
jax: 0.10.0
libtpu: 0.0.40
codegen_flags: <defaults>
</compile_context>

<pallas_src>
import functools

import jax
import jax.numpy as jnp
from jax import lax
from jax.experimental import pallas as pl
from jax.experimental.pallas import tpu as pltpu


def _round_up(n, m):
    return ((n + m - 1) // m) * m


# --------------------------------------------------------------------------------------
# kernels
# --------------------------------------------------------------------------------------


def _maxent_resident_kernel(x_ref, w_ref, o_ref):
    """Full (D, C) weight resident in VMEM: one MXU matmul + exact f32 log-softmax epilogue."""
    x = x_ref[...].astype(w_ref.dtype)  # f32 -> compute dtype in VMEM (hidden under the DMA)
    logits = jnp.dot(x, w_ref[...], preferred_element_type=jnp.float32)
    m = jnp.max(logits, axis=-1, keepdims=True)
    shifted = logits - m
    lse = jnp.log(jnp.sum(jnp.exp(shifted), axis=-1, keepdims=True))
    o_ref[...] = (shifted - lse).astype(o_ref.dtype)


def _maxent_tiled_kernel(x_ref, w_ref, o_ref, acc_ref, m_ref, l_ref,
                         *, num_classes, tc, num_class_tiles):
    """Class-tiled path: stream (D, tc) weight tiles, online logsumexp across class tiles."""
    j = pl.program_id(1)

    @pl.when(j == 0)
    def _():
        m_ref[...] = jnp.full_like(m_ref, -jnp.inf)
        l_ref[...] = jnp.zeros_like(l_ref)

    x = x_ref[...].astype(w_ref.dtype)
    logits = jnp.dot(x, w_ref[...], preferred_element_type=jnp.float32)  # (tb, tc)

    # Columns past num_classes (the ragged last weight tile reads stale VMEM) must not
    # contribute to the softmax: mask them to -inf before the max / sum.
    col = lax.broadcasted_iota(jnp.int32, logits.shape, 1) + j * tc
    logits = jnp.where(col < num_classes, logits, jnp.float32(-jnp.inf))

    # Online logsumexp update.
    m_prev = m_ref[...]
    m_new = jnp.maximum(m_prev, jnp.max(logits, axis=-1, keepdims=True))
    l_ref[...] = l_ref[...] * jnp.exp(m_prev - m_new) + jnp.sum(
        jnp.exp(logits - m_new), axis=-1, keepdims=True)
    m_ref[...] = m_new

    # Stash this class tile's raw logits (leading-dim dynamic store, re-read at finalize).
    acc_ref[j] = logits

    @pl.when(j == num_class_tiles - 1)
    def _():
        lse = m_ref[...] + jnp.log(l_ref[...])
        for jj in range(num_class_tiles):  # static unroll at trace time
            lo = jj * tc
            width = min(tc, num_classes - lo)
            o_ref[:, lo:lo + width] = (acc_ref[jj, :, :width] - lse).astype(o_ref.dtype)


# --------------------------------------------------------------------------------------
# hardware queries / planning
# --------------------------------------------------------------------------------------


@functools.lru_cache()
def _vmem_budget_bytes():
    try:
        cap = int(pltpu.get_tpu_info().vmem_capacity_bytes)
    except Exception:
        cap = 64 * 2 ** 20  # conservative (v7x-sized) fallback
    return int(cap * 0.75)


@functools.lru_cache()
def _num_tensorcores():
    try:
        info = pltpu.get_tpu_info()
        for name in ("num_cores", "core_count", "num_tensorcores", "tensorcores_per_chip"):
            v = getattr(info, name, None)
            if v:
                return int(v)
    except Exception:
        pass
    try:
        return int(getattr(jax.devices()[0], "num_cores", 1) or 1)
    except Exception:
        return 1


def _pick_tb(batch, tb_max, fits):
    if batch < 8:
        return batch if fits(batch) else None  # full-extent block is exempt from the 8-sublane rule
    cands = [c for c in (512, 256, 128, 64, 32, 16, 8) if c <= min(tb_max, batch)]
    for tb in cands:
        if fits(tb):
            return tb
    return None


def _plan(B, D, C, x_bytes, w_bytes, out_bytes, budget, tb_max, force_class_tiled):
    f32 = 4

    def resident_need(tb):
        return (2 * tb * D * x_bytes        # double-buffered x tiles (HBM dtype)
                + tb * D * w_bytes          # in-kernel compute-dtype copy of the x tile
                + 1 * D * C * w_bytes       # single-buffered resident weight
                + 2 * tb * C * out_bytes    # double-buffered output tiles
                + 4 * tb * C * f32)         # f32 epilogue temporaries (logits/shifted/exp)

    def tiled_need(tb, tc):
        return (2 * tb * D * x_bytes
                + tb * D * w_bytes
                + 2 * D * tc * w_bytes      # double-buffered streamed weight tiles
                + 2 * tb * C * out_bytes
                + tb * _round_up(C, tc) * f32   # raw-logits scratch
                + 3 * tb * tc * f32         # f32 temporaries
                + 4 * tb * f32)             # m / l scratch

    if not force_class_tiled:
        tb = _pick_tb(B, tb_max, lambda t: resident_need(t) <= budget)
        if tb is not None:
            return "resident", tb, None

    for tc in (512, 256, 128):
        if tc > _round_up(C, 128):
            continue
        tb = _pick_tb(B, tb_max, lambda t: tiled_need(t, tc) <= budget)
        if tb is not None:
            return "tiled", tb, tc

    # TODO(synk): for extreme D*C even the smallest class-tiled config exceeds the budget
    # (huge C at tb=8); fall through with the smallest tiles and let Mosaic try.
    return "tiled", (8 if B >= 8 else B), 128


# --------------------------------------------------------------------------------------
# public API
# --------------------------------------------------------------------------------------


def prepare_weight(weight, compute_dtype=jnp.bfloat16):
    """One-time (hoisted) weight prep: (C, D) nn.Linear layout -> (D, C) in compute_dtype.

    Use compute_dtype=jnp.float32 for strict PyTorch-f32 parity (slower MXU path).
    # TODO(synk): optional fp8(e4m3) weight storage on v7x (int8 on v5e/v6e) to halve the
    # resident-weight VMEM footprint / weight DMA bytes when accuracy permits.
    """
    return jnp.asarray(weight).T.astype(compute_dtype)


def max_entropy_apply(x, wt, num_classes, *, out_dtype=None, tb_max=512,
                      block_b=None, block_c=None, force_class_tiled=False):
    """x: (B, input_dim); wt: (input_dim, num_classes) from prepare_weight().

    Returns log_softmax(x @ wt, axis=1) with shape (B, num_classes).
    """
    B, D = x.shape
    Dw, C = wt.shape
    assert Dw == D and C == num_classes
    out_dtype = out_dtype or x.dtype  # keep module semantics (f32 in -> f32 out) by default

    budget = _vmem_budget_bytes()
    x_bytes = jnp.dtype(x.dtype).itemsize
    w_bytes = jnp.dtype(wt.dtype).itemsize
    out_bytes = jnp.dtype(out_dtype).itemsize

    mode, tb, tc = _plan(B, D, C, x_bytes, w_bytes, out_bytes, budget, tb_max,
                         force_class_tiled)
    if block_b is not None:
        tb = block_b
    if block_c is not None and mode == "tiled":
        tc = block_c

    # Split a single-step batch across TensorCores only on megacore parts, and never
    # below ~128 rows per step (per-step overhead dominates otherwise).
    if mode == "resident" and _num_tensorcores() >= 2 and pl.cdiv(B, tb) == 1 and B >= 256:
        tb = max(128, _round_up(pl.cdiv(B, 2), 8))

    grid_b = pl.cdiv(B, tb)
    cost = pl.CostEstimate(
        flops=2 * B * D * C,
        transcendentals=B * C,
        bytes_accessed=B * D * x_bytes + D * C * w_bytes + B * C * out_bytes,
    )

    if mode == "resident":
        def call(weight_pipeline_mode):
            if weight_pipeline_mode is None:
                w_spec = pl.BlockSpec((D, C), lambda i: (0, 0))
            else:
                w_spec = pl.BlockSpec((D, C), lambda i: (0, 0),
                                      pipeline_mode=weight_pipeline_mode)
            return pl.pallas_call(
                _maxent_resident_kernel,
                out_shape=jax.ShapeDtypeStruct((B, C), out_dtype),
                grid_spec=pltpu.PrefetchScalarGridSpec(
                    num_scalar_prefetch=0,
                    grid=(grid_b,),
                    in_specs=[pl.BlockSpec((tb, D), lambda i: (i, 0)), w_spec],
                    out_specs=pl.BlockSpec((tb, C), lambda i: (i, 0)),
                ),
                compiler_params=pltpu.CompilerParams(
                    dimension_semantics=("parallel",),
                    vmem_limit_bytes=budget,
                ),
                cost_estimate=cost,
            )(x, wt)

        try:
            # Constant block index -> a single VMEM buffer suffices; halves the largest consumer.
            return call(pl.Buffered(1))
        except Exception:
            return call(None)

    # ----- class-tiled path -----
    grid_c = pl.cdiv(C, tc)
    kernel = functools.partial(_maxent_tiled_kernel, num_classes=C, tc=tc,
                               num_class_tiles=grid_c)
    return pl.pallas_call(
        kernel,
        out_shape=jax.ShapeDtypeStruct((B, C), out_dtype),
        grid_spec=pltpu.PrefetchScalarGridSpec(
            num_scalar_prefetch=0,
            grid=(grid_b, grid_c),
            in_specs=[
                pl.BlockSpec((tb, D), lambda i, j: (i, 0)),   # x tile, constant across classes
                pl.BlockSpec((D, tc), lambda i, j: (0, j)),   # streamed weight tiles
            ],
            out_specs=pl.BlockSpec((tb, C), lambda i, j: (i, 0)),  # resident across class axis
            scratch_shapes=[
                pltpu.VMEM((grid_c, tb, tc), jnp.float32),  # raw logits
                pltpu.VMEM((tb, 1), jnp.float32),           # running max
                pltpu.VMEM((tb, 1), jnp.float32),           # running sum
            ],
        ),
        compiler_params=pltpu.CompilerParams(
            dimension_semantics=("parallel", "arbitrary"),
            vmem_limit_bytes=budget,
        ),
        cost_estimate=cost,
    )(x, wt)


def max_entropy_forward(x, weight, **kwargs):
    """Convenience wrapper (prefer prepare_weight() once + max_entropy_apply() per batch)."""
    wt = prepare_weight(weight)
    return max_entropy_apply(x, wt, wt.shape[1], **kwargs)


# --------------------------------------------------------------------------------------
# demo / self-test
# --------------------------------------------------------------------------------------

if __name__ == "__main__":
    key = jax.random.PRNGKey(0)
    kx1, kw1, kx2, kw2 = jax.random.split(key, 4)

    # --- case 1: tiny model (resident-weight path), module-sized shapes ------------------
    B, D, C = 8, 32, 10
    x = jax.random.normal(kx1, (B, D), dtype=jnp.float32)
    weight = jax.random.normal(kw1, (C, D), dtype=jnp.float32) * 0.1  # nn.Linear (C, D)

    wt = prepare_weight(weight)                      # hoisted, one-time
    out = jax.block_until_ready(max_entropy_apply(x, wt, C))

    ref_bf16 = jax.nn.log_softmax(
        jnp.dot(x.astype(jnp.bfloat16), weight.T.astype(jnp.bfloat16),
                preferred_element_type=jnp.float32), axis=1)
    ref_f32 = jax.nn.log_softmax(x @ weight.T, axis=1)

    assert out.shape == (B, C)
    assert bool(jnp.all(jnp.isfinite(out)))
    assert jnp.allclose(out, ref_bf16, atol=2e-3, rtol=2e-3)
    assert jnp.allclose(out, ref_f32, atol=2e-2, rtol=2e-2)

    # --- case 2: ragged batch + forced class-tiled path (online logsumexp) ----------------
    B2, D2, C2 = 20, 64, 200
    x2 = jax.random.normal(kx2, (B2, D2), dtype=jnp.float32)
    w2 = jax.random.normal(kw2, (C2, D2), dtype=jnp.float32) * 0.1
    wt2 = prepare_weight(w2)
    out2 = jax.block_until_ready(
        max_entropy_apply(x2, wt2, C2, force_class_tiled=True, block_b=16, block_c=128))

    ref2_bf16 = jax.nn.log_softmax(
        jnp.dot(x2.astype(jnp.bfloat16), w2.T.astype(jnp.bfloat16),
                preferred_element_type=jnp.float32), axis=1)
    ref2_f32 = jax.nn.log_softmax(x2 @ w2.T, axis=1)

    assert out2.shape == (B2, C2)
    assert bool(jnp.all(jnp.isfinite(out2)))
    assert jnp.allclose(out2, ref2_bf16, atol=2e-3, rtol=2e-3)
    assert jnp.allclose(out2, ref2_f32, atol=2e-2, rtol=2e-2)

    print("KERNEL_OK")
</pallas_src>

<mosaic_0001>
module attributes {stable_mosaic.version = 11 : i64} {
  func.func @_maxent_resident_kernel(%arg0: i32, %arg1: memref<8x32xf32, #tpu.memory_space<vmem>>, %arg2: memref<32x10xbf16, #tpu.memory_space<vmem>>, %arg3: memref<8x10xf32, #tpu.memory_space<vmem>>) attributes {dimension_semantics = [#tpu.dimension_semantics<parallel>], iteration_bounds = array<i64: 1>, scalar_prefetch = 0 : i64, scratch_operands = 0 : i64, tpu.core_type = #tpu.core_type<tc>, window_params = [{transform_indices = @transform_0, window_bounds = array<i64: 8, 32>}, {pipeline_mode = #tpu.pipeline_mode<synchronous>, transform_indices = @transform_1, window_bounds = array<i64: 32, 10>}, {transform_indices = @transform_2, window_bounds = array<i64: 8, 10>}]} {
    %c0 = arith.constant 0 : index
    %c0_0 = arith.constant 0 : index
    %0 = vector.load %arg1[%c0, %c0_0] : memref<8x32xf32, #tpu.memory_space<vmem>>, vector<8x32xf32>
    %1 = arith.truncf %0 : vector<8x32xf32> to vector<8x32xbf16>
    %c0_1 = arith.constant 0 : index
    %c0_2 = arith.constant 0 : index
    %2 = vector.load %arg2[%c0_1, %c0_2] : memref<32x10xbf16, #tpu.memory_space<vmem>>, vector<32x10xbf16>
    %cst = arith.constant dense<0.000000e+00> : vector<8x10xf32>
    %3 = tpu.matmul %1, %2, %cst {dimension_numbers = #tpu.dot_dimension_numbers<[1], [0], [0], [1], [0, 0, 1, 1], [], []>} : vector<8x32xbf16>, vector<32x10xbf16>, vector<8x10xf32> -> vector<8x10xf32>
    %cst_3 = arith.constant dense<0xFF800000> : vector<8xf32>
    %4 = vector.multi_reduction <maximumf>, %3, %cst_3 [1] : vector<8x10xf32> to vector<8xf32>
    %5 = vector.shape_cast %4 : vector<8xf32> to vector<8x1xf32>
    %6 = vector.broadcast %5 : vector<8x1xf32> to vector<8x10xf32>
    %7 = arith.subf %3, %6 : vector<8x10xf32>
    %8 = math.exp %7 : vector<8x10xf32>
    %cst_4 = arith.constant dense<0.000000e+00> : vector<8xf32>
    %9 = vector.multi_reduction <add>, %8, %cst_4 [1] : vector<8x10xf32> to vector<8xf32>
    %10 = vector.shape_cast %9 : vector<8xf32> to vector<8x1xf32>
    %11 = math.log %10 : vector<8x1xf32>
    %12 = vector.broadcast %11 : vector<8x1xf32> to vector<8x10xf32>
    %13 = arith.subf %7, %12 : vector<8x10xf32>
    %c0_5 = arith.constant 0 : index
    %c0_6 = arith.constant 0 : index
    %14 = vector.load %arg3[%c0_5, %c0_6] : memref<8x10xf32, #tpu.memory_space<vmem>>, vector<8x10xf32>
    tpu.vector_store %arg3[%c0_5, %c0_6], %13 {strides = array<i32>} : memref<8x10xf32, #tpu.memory_space<vmem>>, vector<8x10xf32>,
    return
  }
  func.func @transform_0(%arg0: i32) -> (i32, i32) {
    %c0_i32 = arith.constant 0 : i32
    %c0_i32_0 = arith.constant 0 : i32
    return %arg0, %c0_i32 : i32, i32
  }
  func.func @transform_1(%arg0: i32) -> (i32, i32) {
    %c0_i32 = arith.constant 0 : i32
    %c0_i32_0 = arith.constant 0 : i32
    %c0_i32_1 = arith.constant 0 : i32
    return %c0_i32, %c0_i32_0 : i32, i32
  }
  func.func @transform_2(%arg0: i32) -> (i32, i32) {
    %c0_i32 = arith.constant 0 : i32
    %c0_i32_0 = arith.constant 0 : i32
    return %arg0, %c0_i32 : i32, i32
  }
}

module attributes {stable_mosaic.version = 11 : i64} {
  func.func @_maxent_resident_kernel(%arg0: i32, %arg1: memref<8x32xf32, #tpu.memory_space<vmem>>, %arg2: memref<32x10xbf16, #tpu.memory_space<vmem>>, %arg3: memref<8x10xf32, #tpu.memory_space<vmem>>) attributes {dimension_semantics = [#tpu.dimension_semantics<parallel>], iteration_bounds = array<i64: 1>, scalar_prefetch = 0 : i64, scratch_operands = 0 : i64, tpu.core_type = #tpu.core_type<tc>, window_params = [{transform_indices = @transform_0, window_bounds = array<i64: 8, 32>}, {pipeline_mode = #tpu.pipeline_mode<synchronous>, transform_indices = @transform_1, window_bounds = array<i64: 32, 10>}, {transform_indices = @transform_2, window_bounds = array<i64: 8, 10>}]} {
    %c0 = arith.constant 0 : index
    %c0_0 = arith.constant 0 : index
    %0 = vector.load %arg1[%c0, %c0_0] : memref<8x32xf32, #tpu.memory_space<vmem>>, vector<8x32xf32>
    %1 = arith.truncf %0 : vector<8x32xf32> to vector<8x32xbf16>
    %c0_1 = arith.constant 0 : index
    %c0_2 = arith.constant 0 : index
    %2 = vector.load %arg2[%c0_1, %c0_2] : memref<32x10xbf16, #tpu.memory_space<vmem>>, vector<32x10xbf16>
    %cst = arith.constant dense<0.000000e+00> : vector<8x10xf32>
    %3 = tpu.matmul %1, %2, %cst {dimension_numbers = #tpu.dot_dimension_numbers<[1], [0], [0], [1], [0, 0, 1, 1], [], []>} : vector<8x32xbf16>, vector<32x10xbf16>, vector<8x10xf32> -> vector<8x10xf32>
    %cst_3 = arith.constant dense<0xFF800000> : vector<8xf32>
    %4 = vector.multi_reduction <maximumf>, %3, %cst_3 [1] : vector<8x10xf32> to vector<8xf32>
    %5 = vector.shape_cast %4 : vector<8xf32> to vector<8x1xf32>
    %6 = vector.broadcast %5 : vector<8x1xf32> to vector<8x10xf32>
    %7 = arith.subf %3, %6 : vector<8x10xf32>
    %8 = math.exp %7 : vector<8x10xf32>
    %cst_4 = arith.constant dense<0.000000e+00> : vector<8xf32>
    %9 = vector.multi_reduction <add>, %8, %cst_4 [1] : vector<8x10xf32> to vector<8xf32>
    %10 = vector.shape_cast %9 : vector<8xf32> to vector<8x1xf32>
    %11 = math.log %10 : vector<8x1xf32>
    %12 = vector.broadcast %11 : vector<8x1xf32> to vector<8x10xf32>
    %13 = arith.subf %7, %12 : vector<8x10xf32>
    %c0_5 = arith.constant 0 : index
    %c0_6 = arith.constant 0 : index
    %14 = vector.load %arg3[%c0_5, %c0_6] : memref<8x10xf32, #tpu.memory_space<vmem>>, vector<8x10xf32>
    tpu.vector_store %arg3[%c0_5, %c0_6], %13 {strides = array<i32>} : memref<8x10xf32, #tpu.memory_space<vmem>>, vector<8x10xf32>,
    return
  }
  func.func @transform_0(%arg0: i32) -> (i32, i32) {
    %c0_i32 = arith.constant 0 : i32
    %c0_i32_0 = arith.constant 0 : i32
    return %arg0, %c0_i32 : i32, i32
  }
  func.func @transform_1(%arg0: i32) -> (i32, i32) {
    %c0_i32 = arith.constant 0 : i32
    %c0_i32_0 = arith.constant 0 : i32
    %c0_i32_1 = arith.constant 0 : i32
    return %c0_i32, %c0_i32_0 : i32, i32
  }
  func.func @transform_2(%arg0: i32) -> (i32, i32) {
    %c0_i32 = arith.constant 0 : i32
    %c0_i32_0 = arith.constant 0 : i32
    return %arg0, %c0_i32 : i32, i32
  }
}

</mosaic_0001>

<llo_original>
// kernel: tpu_custom_call.1
$region0: #{tpu_custom_call.1}
  #allocation0 [shape = 'u32[]', space=smem, size = 0x4, offset = 0x4, fixed_abs, tag = 'smem constant byte address 0x4 - core index']
  #allocation1 [shape = 'u32[144,128]{1,0:T(1,128)}', space=vmem, size = 0x12000, scoped, tag = 'internal scratch']
  %s0 = inlined_call_operand.vmem [shape: f32[8,32], index: 0, kind: input, shape index: {}]
  %s1 = inlined_call_operand.vmem [shape: bf16[32,10], index: 1, kind: input, shape index: {}]
  %s2 = inlined_call_operand.hbm [shape: f32[8,10], index: 2, kind: output, shape index: {}]
  %s3 = sld [smem:[#allocation0]]
  $region18: #{tpu_custom_call.1} parent=0
    _
  %s5 = ssub.s32 1, %s3
  %s6 = scalar_select 0, %s5, %s3
  $region1: #{tpu_custom_call.1} parent=0
    #allocation2 [shape = 'u8[4096]{0}', space=vmem, size = 0x1000, scoped, tag = 'output window, operand 0, single buffered']
    #allocation3 [shape = 's32[1]{0}', space=sflag, size = 0x4, scoped, tag = 'scoped memory for tpu_custom_call.1']
    %7 = vsyncpa [#allocation3], 0
    // Predicated region
    $region2: #{tpu_custom_call.1} parent=1 // pred_check
      _
    $region3: #{tpu_custom_call.1} parent=1 // pred_check_branch
      %9 = sbr.rel (0) target = $region5
    $region4: #{tpu_custom_call.1} parent=1 // pred_region
      _
    $region5: #{tpu_custom_call.1} parent=1 // pred_fallthru
      _
    // Predicated region
    $region6: #{tpu_custom_call.1} parent=1 // pred_check
      _
    $region7: #{tpu_custom_call.1} parent=1 // pred_check_branch
      %11 = sbr.rel (0) target = $region9
    $region8: #{tpu_custom_call.1} parent=1 // pred_region
      _
    $region9: #{tpu_custom_call.1} parent=1 // pred_fallthru
      _
    %v13 = vld [vmem:[%s0] sm:$0xff]
    %v14 = vpack.c.bf16 %v13, %v13
    %v15 = vld [vmem:[%s1] sm:$0xf]
    %v16 = vld [vmem:[%s1 + $0x4] sm:$0xf]
    %v17 = vld [vmem:[%s1 + $0x8] sm:$0xf]
    %v18 = vld [vmem:[%s1 + $0xc] sm:$0xf]
    %v23 = vunpack.c.l.b16 %v15
    %v24 = vunpack.c.l.b16 %v16
    %v25 = vunpack.c.l.b16 %v17
    %v26 = vunpack.c.l.b16 %v18
    %v27 = vpack.c.b16 %v24, %v23
    %v28 = vpack.c.b16 %v26, %v25
    %vm31 = vcmask 261120
    %v33 = vsel %vm31, %v14, 0
    %35 = vmatprep.subr.bf16.mxu0 0
    %36 = vmatpush1.bf16.msra.mxu0 %v27
    %37 = vmatprep.subr.bf16.mxu0 0
    %38 = vmatpush1.bf16.msra.mxu0 %v28
    %39 = vmatprep.subr.bf16.mxu0 0
    %40 = vmatpush1.bf16.msra.mxu0 0
    %41 = vmatprep.subr.bf16.mxu0 0
    %42 = vmatpush1.bf16.msra.mxu0 0
    %43 = vmatprep.subr.bf16.mxu0 0
    %44 = vmatpush1.bf16.msra.mxu0 0
    %45 = vmatprep.subr.bf16.mxu0 0
    %46 = vmatpush1.bf16.msra.mxu0 0
    %47 = vmatprep.subr.bf16.mxu0 0
    %48 = vmatpush1.bf16.msra.mxu0 0
    %49 = vmatprep.subr.bf16.mxu0 0
    %50 = vmatpush1.bf16.msra.mxu0 0
    %51 = vmatprep.subr.bf16.mxu0 0
    %52 = vmatpush1.bf16.msra.mxu0 0
    %53 = vmatprep.subr.bf16.mxu0 0
    %54 = vmatpush1.bf16.msra.mxu0 0
    %55 = vmatprep.subr.bf16.mxu0 0
    %56 = vmatpush1.bf16.msra.mxu0 0
    %57 = vmatprep.subr.bf16.mxu0 0
    %58 = vmatpush1.bf16.msra.mxu0 0
    %59 = vmatprep.subr.bf16.mxu0 0
    %60 = vmatpush1.bf16.msra.mxu0 0
    %61 = vmatprep.subr.bf16.mxu0 0
    %62 = vmatpush1.bf16.msra.mxu0 0
    %63 = vmatprep.subr.bf16.mxu0 0
    %64 = vmatpush1.bf16.msra.mxu0 0
    %65 = vmatprep.subr.bf16.mxu0 0
    %66 = vmatpush1.bf16.msra.mxu0 0
    %67 = vmatprep.mubr.bf16.mxu0 0
    %68 = vmatmul.mubr.bf16.gmra.mrb[0].mxu0 %v33
    %v69 = vpop.f32.mrb[0].mxu0
    %v70 = vadd.f32 0.0, %v69
    %v71 = vpop.f32.mrb[0].mxu0
    %v72 = vpop.f32.mrb[0].mxu0
    %v73 = vpop.f32.mrb[0].mxu0
    %74 = vdwg.mxu0
    %vm75 = vcmask 80896
    %v76 = vsel %vm75, %v70, -inf
    %77 = vmax.xlane.f32.xlu0 %v76
    %v78 = vpop.xlane.xlu0 %77
    %v79 = vsub.f32 %v70, %v78
    %v80 = vmul.f32 %v79, 1.442695
    %v81 = vpow.pop %v80
    %v82 = vsel %vm75, %v81, 0.0
    %83 = vadd.xlane.f32.xlu0 %v82
    %v84 = vpop.xlane.xlu0 %83
    %v85 = vlog2.pop %v84
    %v86 = vmul.f32 %v85, 0.6931472
    %v87 = vsub.f32 %v79, %v86
    %88 = vst.msk [vmem:[#allocation2] sm:$0xff] %vm75, %v87
    // Predicated region
    $region10: #{tpu_custom_call.1} parent=1 // pred_check
      _
    $region11: #{tpu_custom_call.1} parent=1 // pred_check_branch
      %90 = sbr.rel (0) target = $region13
    $region12: #{tpu_custom_call.1} parent=1 // pred_region
      %s92 = ssub.s32 128, 128
      %93 = vsyncadd [#allocation3], %s92
      %s95 = sshll.u32 [#allocation2], 4
      %s96 = int_to_ptr.vmem [resolvable:$true] %s95
      %98 = dma.vmem_to_hbm [thread:$0]  %s96, 128, %s2, [#allocation3]
    $region13: #{tpu_custom_call.1} parent=1 // pred_fallthru
      _
    // Predicated region
    $region14: #{tpu_custom_call.1} parent=1 // pred_check
      _
    $region15: #{tpu_custom_call.1} parent=1 // pred_check_branch
      %100 = sbr.rel (0) target = $region17
    $region16: #{tpu_custom_call.1} parent=1 // pred_region
      %101 = dma.done [#allocation3], 128
    $region17: #{tpu_custom_call.1} parent=1 // pred_fallthru
      _
    %102 = vsyncpa [#allocation3], 1

// kernel: tpu_custom_call.1
$region0: #{tpu_custom_call.1}
  #allocation0 [shape = 'u32[]', space=smem, size = 0x4, offset = 0x4, fixed_abs, tag = 'smem constant byte address 0x4 - core index']
  #allocation1 [shape = 'u32[144,128]{1,0:T(1,128)}', space=vmem, size = 0x12000, scoped, tag = 'internal scratch']
  %s0 = inlined_call_operand.vmem [shape: f32[8,32], index: 0, kind: input, shape index: {}]
  %s1 = inlined_call_operand.vmem [shape: bf16[32,10], index: 1, kind: input, shape index: {}]
  %s2 = inlined_call_operand.hbm [shape: f32[8,10], index: 2, kind: output, shape index: {}]
  %s3 = sld [smem:[#allocation0]]
  $region18: #{tpu_custom_call.1} parent=0
    _
  %s5 = ssub.s32 1, %s3
  %s6 = scalar_select 0, %s5, %s3
  $region1: #{tpu_custom_call.1} parent=0
    #allocation2 [shape = 'u8[4096]{0}', space=vmem, size = 0x1000, scoped, tag = 'output window, operand 0, single buffered']
    #allocation3 [shape = 's32[1]{0}', space=sflag, size = 0x4, scoped, tag = 'scoped memory for tpu_custom_call.1']
    %7 = vsyncpa [#allocation3], 0
    // Predicated region
    $region2: #{tpu_custom_call.1} parent=1 // pred_check
      _
    $region3: #{tpu_custom_call.1} parent=1 // pred_check_branch
      %9 = sbr.rel (0) target = $region5
    $region4: #{tpu_custom_call.1} parent=1 // pred_region
      _
    $region5: #{tpu_custom_call.1} parent=1 // pred_fallthru
      _
    // Predicated region
    $region6: #{tpu_custom_call.1} parent=1 // pred_check
      _
    $region7: #{tpu_custom_call.1} parent=1 // pred_check_branch
      %11 = sbr.rel (0) target = $region9
    $region8: #{tpu_custom_call.1} parent=1 // pred_region
      _
    $region9: #{tpu_custom_call.1} parent=1 // pred_fallthru
      _
    %v13 = vld [vmem:[%s0] sm:$0xff]
    %v14 = vpack.c.bf16 %v13, %v13
    %v15 = vld [vmem:[%s1] sm:$0xf]
    %v16 = vld [vmem:[%s1 + $0x4] sm:$0xf]
    %v17 = vld [vmem:[%s1 + $0x8] sm:$0xf]
    %v18 = vld [vmem:[%s1 + $0xc] sm:$0xf]
    %v23 = vunpack.c.l.b16 %v15
    %v24 = vunpack.c.l.b16 %v16
    %v25 = vunpack.c.l.b16 %v17
    %v26 = vunpack.c.l.b16 %v18
    %v27 = vpack.c.b16 %v24, %v23
    %v28 = vpack.c.b16 %v26, %v25
    %vm31 = vcmask 261120
    %v33 = vsel %vm31, %v14, 0
    %35 = vmatprep.subr.bf16.mxu0 0
    %36 = vmatpush1.bf16.msra.mxu0 %v27
    %37 = vmatprep.subr.bf16.mxu0 0
    %38 = vmatpush1.bf16.msra.mxu0 %v28
    %39 = vmatprep.subr.bf16.mxu0 0
    %40 = vmatpush1.bf16.msra.mxu0 0
    %41 = vmatprep.subr.bf16.mxu0 0
    %42 = vmatpush1.bf16.msra.mxu0 0
    %43 = vmatprep.subr.bf16.mxu0 0
    %44 = vmatpush1.bf16.msra.mxu0 0
    %45 = vmatprep.subr.bf16.mxu0 0
    %46 = vmatpush1.bf16.msra.mxu0 0
    %47 = vmatprep.subr.bf16.mxu0 0
    %48 = vmatpush1.bf16.msra.mxu0 0
    %49 = vmatprep.subr.bf16.mxu0 0
    %50 = vmatpush1.bf16.msra.mxu0 0
    %51 = vmatprep.subr.bf16.mxu0 0
    %52 = vmatpush1.bf16.msra.mxu0 0
    %53 = vmatprep.subr.bf16.mxu0 0
    %54 = vmatpush1.bf16.msra.mxu0 0
    %55 = vmatprep.subr.bf16.mxu0 0
    %56 = vmatpush1.bf16.msra.mxu0 0
    %57 = vmatprep.subr.bf16.mxu0 0
    %58 = vmatpush1.bf16.msra.mxu0 0
    %59 = vmatprep.subr.bf16.mxu0 0
    %60 = vmatpush1.bf16.msra.mxu0 0
    %61 = vmatprep.subr.bf16.mxu0 0
    %62 = vmatpush1.bf16.msra.mxu0 0
    %63 = vmatprep.subr.bf16.mxu0 0
    %64 = vmatpush1.bf16.msra.mxu0 0
    %65 = vmatprep.subr.bf16.mxu0 0
    %66 = vmatpush1.bf16.msra.mxu0 0
    %67 = vmatprep.mubr.bf16.mxu0 0
    %68 = vmatmul.mubr.bf16.gmra.mrb[0].mxu0 %v33
    %v69 = vpop.f32.mrb[0].mxu0
    %v70 = vadd.f32 0.0, %v69
    %v71 = vpop.f32.mrb[0].mxu0
    %v72 = vpop.f32.mrb[0].mxu0
    %v73 = vpop.f32.mrb[0].mxu0
    %74 = vdwg.mxu0
    %vm75 = vcmask 80896
    %v76 = vsel %vm75, %v70, -inf
    %77 = vmax.xlane.f32.xlu0 %v76
    %v78 = vpop.xlane.xlu0 %77
    %v79 = vsub.f32 %v70, %v78
    %v80 = vmul.f32 %v79, 1.442695
    %v81 = vpow.pop %v80
    %v82 = vsel %vm75, %v81, 0.0
    %83 = vadd.xlane.f32.xlu0 %v82
    %v84 = vpop.xlane.xlu0 %83
    %v85 = vlog2.pop %v84
    %v86 = vmul.f32 %v85, 0.6931472
    %v87 = vsub.f32 %v79, %v86
    %88 = vst.msk [vmem:[#allocation2] sm:$0xff] %vm75, %v87
    // Predicated region
    $region10: #{tpu_custom_call.1} parent=1 // pred_check
      _
    $region11: #{tpu_custom_call.1} parent=1 // pred_check_branch
      %90 = sbr.rel (0) target = $region13
    $region12: #{tpu_custom_call.1} parent=1 // pred_region
      %s92 = ssub.s32 128, 128
      %93 = vsyncadd [#allocation3], %s92
      %s95 = sshll.u32 [#allocation2], 4
      %s96 = int_to_ptr.vmem [resolvable:$true] %s95
      %98 = dma.vmem_to_hbm [thread:$0]  %s96, 128, %s2, [#allocation3]
    $region13: #{tpu_custom_call.1} parent=1 // pred_fallthru
      _
    // Predicated region
    $region14: #{tpu_custom_call.1} parent=1 // pred_check
      _
    $region15: #{tpu_custom_call.1} parent=1 // pred_check_branch
      %100 = sbr.rel (0) target = $region17
    $region16: #{tpu_custom_call.1} parent=1 // pred_region
      %101 = dma.done [#allocation3], 128
    $region17: #{tpu_custom_call.1} parent=1 // pred_fallthru
      _
    %102 = vsyncpa [#allocation3], 1

</llo_original>
